<compile_context>
chip_gen: v5e
topology: v5e:2x2
jax: 0.10.0
libtpu: 0.0.40
codegen_flags: <defaults>
</compile_context>

<pallas_src>
import functools

import jax
import jax.numpy as jnp
from jax.experimental import pallas as pl
from jax.experimental.pallas import tpu as pltpu


def _round_up(n: int, m: int) -> int:
    return ((n + m - 1) // m) * m


def _linear_kernel(x_ref, w_ref, b_ref, o_ref):
    # MXU matmul with f32 accumulation, bias add on the VPU; all tiles are
    # lane-dense on the output axis (N_pad multiple of 128).
    acc = jnp.dot(x_ref[...], w_ref[...], preferred_element_type=jnp.float32)
    o_ref[...] = (acc + b_ref[...].astype(jnp.float32)).astype(o_ref.dtype)


def prepare_params(weight, bias, dtype=None):
    """One-time parameter conversion (call once, NOT per forward pass).

    weight: (output_bands, input_dim)  -- PyTorch nn.Linear weight
    bias:   (output_bands,)
    dtype:  optional storage dtype for the prepared weight (e.g. jnp.bfloat16
            when the producer also streams x in bf16); accumulation stays f32.
    returns (w_t_padded, b_padded):
       w_t_padded: (input_dim, N_pad)  pre-transposed weight, N zero-padded to 128
       b_padded:   (1, N_pad)          zero-padded f32 bias row
    """
    n_out, k_in = weight.shape
    n_pad = _round_up(n_out, 128)
    w_dtype = weight.dtype if dtype is None else dtype
    w_t = jnp.zeros((k_in, n_pad), w_dtype).at[:, :n_out].set(
        weight.T.astype(w_dtype))
    b = jnp.zeros((1, n_pad), jnp.float32).at[0, :n_out].set(
        bias.astype(jnp.float32))
    return w_t, b


_GRIDLESS_MAX_BATCH = 256   # below this, one VMEM tile / no pipeline wins
_TB_CAP = 2048              # max batch-tile rows (few MiB even double-buffered)


def _choose_tb(batch: int) -> int:
    # At least ~4 grid steps so v7x's two TensorCores both get work on the
    # "parallel" batch axis; cap tile size to amortize per-step overhead on
    # v5e/v6e without growing VMEM; always a multiple of 8 (sublane).
    tb = _round_up(pl.cdiv(batch, 4), 8)
    return max(8, min(_TB_CAP, tb))


def mask_reconstruction_head(x, w_t_padded, b_padded, *, out_bands):
    """Forward pass of MaskReconstructionHead.

    x:          (batch, input_dim)
    w_t_padded: (input_dim, N_pad)  from prepare_params
    b_padded:   (1, N_pad)          from prepare_params
    returns     (batch, out_bands)
    """
    batch, k_in = x.shape
    k_w, n_pad = w_t_padded.shape
    assert k_w == k_in, "weight was prepared for a different input_dim"

    cost = pl.CostEstimate(
        flops=2 * batch * k_in * n_pad,
        transcendentals=0,
        bytes_accessed=(x.size * x.dtype.itemsize
                        + w_t_padded.size * w_t_padded.dtype.itemsize
                        + b_padded.size * b_padded.dtype.itemsize
                        + batch * n_pad * x.dtype.itemsize),
    )

    if batch <= _GRIDLESS_MAX_BATCH:
        # Grid-less call: whole problem is one VMEM tile, no pipeline overhead.
        y = pl.pallas_call(
            _linear_kernel,
            out_shape=jax.ShapeDtypeStruct((batch, n_pad), x.dtype),
            in_specs=[
                pl.BlockSpec(memory_space=pltpu.MemorySpace.VMEM),
                pl.BlockSpec(memory_space=pltpu.MemorySpace.VMEM),
                pl.BlockSpec(memory_space=pltpu.MemorySpace.VMEM),
            ],
            out_specs=pl.BlockSpec(memory_space=pltpu.MemorySpace.VMEM),
            cost_estimate=cost,
        )(x, w_t_padded, b_padded)
    else:
        # Stream x / y over batch tiles; weight + bias stay resident (constant
        # index_map).  No batch padding: the ragged last block's reads are
        # confined to isolated output rows and its out-of-bounds writes are
        # masked by Pallas, so the result rows [0, batch) are exact.
        tb = _choose_tb(batch)
        y = pl.pallas_call(
            _linear_kernel,
            out_shape=jax.ShapeDtypeStruct((batch, n_pad), x.dtype),
            grid_spec=pltpu.PrefetchScalarGridSpec(
                num_scalar_prefetch=0,
                grid=(pl.cdiv(batch, tb),),
                in_specs=[
                    pl.BlockSpec((tb, k_in), lambda i: (i, 0)),
                    pl.BlockSpec((k_in, n_pad), lambda i: (0, 0)),
                    pl.BlockSpec((1, n_pad), lambda i: (0, 0)),
                ],
                out_specs=pl.BlockSpec((tb, n_pad), lambda i: (i, 0)),
            ),
            compiler_params=pltpu.CompilerParams(
                dimension_semantics=("parallel",),
            ),
            cost_estimate=cost,
        )(x, w_t_padded, b_padded)

    # Narrow the lane-dense N_pad columns to the true output width.  This is a
    # cheap slice under jit; consumers that can accept the padded array should
    # take `y` directly so the slice fuses away completely.
    return y[:, :out_bands]


if __name__ == "__main__":
    key = jax.random.PRNGKey(0)
    kx, kw, kb, kx2 = jax.random.split(key, 4)

    batch = 8
    input_dim = 64        # embed_dim
    output_bands = 100    # non-multiple of 128 to exercise N padding + slicing

    x = jax.random.normal(kx, (batch, input_dim), dtype=jnp.float32)

    # PyTorch nn.Linear default init: uniform(-k, k), k = 1/sqrt(in_features)
    k = 1.0 / (input_dim ** 0.5)
    weight = jax.random.uniform(kw, (output_bands, input_dim),
                                minval=-k, maxval=k, dtype=jnp.float32)
    bias = jax.random.uniform(kb, (output_bands,),
                              minval=-k, maxval=k, dtype=jnp.float32)

    # One-time parameter conversion (pre-transpose + N-pad), outside hot path.
    w_t_padded, b_padded = prepare_params(weight, bias)

    fwd = jax.jit(functools.partial(mask_reconstruction_head,
                                    out_bands=output_bands))

    # --- small-batch (grid-less) path ---
    out = jax.block_until_ready(fwd(x, w_t_padded, b_padded))
    ref = x @ weight.T + bias
    assert out.shape == (batch, output_bands)
    assert jnp.allclose(out, ref, atol=1e-4, rtol=1e-4)

    # --- large-batch (batch-tiled, resident weight, ragged last block) path ---
    batch_big = 1000  # not a multiple of the chosen tile -> exercises masking
    x_big = jax.random.normal(kx2, (batch_big, input_dim), dtype=jnp.float32)
    out_big = jax.block_until_ready(fwd(x_big, w_t_padded, b_padded))
    ref_big = x_big @ weight.T + bias
    assert out_big.shape == (batch_big, output_bands)
    assert jnp.allclose(out_big, ref_big, atol=1e-4, rtol=1e-4)

    print("KERNEL_OK")
</pallas_src>

<mosaic_0001>
module attributes {stable_mosaic.version = 11 : i64} {
  func.func @_linear_kernel(%arg0: memref<8x64xf32, #tpu.memory_space<vmem>>, %arg1: memref<64x128xf32, #tpu.memory_space<vmem>>, %arg2: memref<1x128xf32, #tpu.memory_space<vmem>>, %arg3: memref<8x128xf32, #tpu.memory_space<vmem>>) attributes {dimension_semantics = [], scalar_prefetch = 0 : i64, scratch_operands = 0 : i64, tpu.core_type = #tpu.core_type<tc>} {
    %c0 = arith.constant 0 : index
    %c0_0 = arith.constant 0 : index
    %0 = vector.load %arg0[%c0, %c0_0] : memref<8x64xf32, #tpu.memory_space<vmem>>, vector<8x64xf32>
    %c0_1 = arith.constant 0 : index
    %c0_2 = arith.constant 0 : index
    %1 = vector.load %arg1[%c0_1, %c0_2] : memref<64x128xf32, #tpu.memory_space<vmem>>, vector<64x128xf32>
    %cst = arith.constant dense<0.000000e+00> : vector<8x128xf32>
    %2 = tpu.matmul %0, %1, %cst {dimension_numbers = #tpu.dot_dimension_numbers<[1], [0], [0], [1], [0, 0, 1, 1], [], []>} : vector<8x64xf32>, vector<64x128xf32>, vector<8x128xf32> -> vector<8x128xf32>
    %c0_3 = arith.constant 0 : index
    %c0_4 = arith.constant 0 : index
    %3 = vector.load %arg2[%c0_3, %c0_4] : memref<1x128xf32, #tpu.memory_space<vmem>>, vector<1x128xf32>
    %4 = vector.broadcast %3 : vector<1x128xf32> to vector<8x128xf32>
    %5 = arith.addf %2, %4 : vector<8x128xf32>
    %c0_5 = arith.constant 0 : index
    %c0_6 = arith.constant 0 : index
    %6 = vector.load %arg3[%c0_5, %c0_6] : memref<8x128xf32, #tpu.memory_space<vmem>>, vector<8x128xf32>
    tpu.vector_store %arg3[%c0_5, %c0_6], %5 {strides = array<i32>} : memref<8x128xf32, #tpu.memory_space<vmem>>, vector<8x128xf32>,
    return
  }
}

</mosaic_0001>

<llo_original>
// kernel: mask_reconstruction_head.1
$region0: #{mask_reconstruction_head.1}
  #allocation0 [shape = 'u32[]', space=smem, size = 0x4, offset = 0x4, fixed_abs, tag = 'smem constant byte address 0x4 - core index']
  #allocation1 [shape = 'u32[72,128]{1,0:T(1,128)}', space=vmem, size = 0x9000, scoped, tag = 'internal scratch']
  %s0 = inlined_call_operand.hbm [shape: f32[8,64], index: 0, kind: input, shape index: {}]
  %s1 = inlined_call_operand.hbm [shape: f32[64,128], index: 1, kind: input, shape index: {}]
  %s2 = inlined_call_operand.vmem [shape: f32[1,128], index: 2, kind: input, shape index: {}]
  %s3 = inlined_call_operand.hbm [shape: f32[8,128], index: 3, kind: output, shape index: {}]
  %s4 = sld [smem:[#allocation0]]
  $region30: #{mask_reconstruction_head.1} parent=0
    _
  %s6 = ssub.s32 1, %s4
  %s7 = scalar_select 0, %s6, %s4
  $region1: #{mask_reconstruction_head.1} parent=0
    #allocation2 [shape = 'u8[4096]{0}', space=vmem, size = 0x1000, scoped, tag = 'input window, operand 0, single buffered']
    #allocation3 [shape = 's32[1]{0}', space=sflag, size = 0x4, scoped, tag = 'scoped memory for mask_reconstruction_head.1']
    #allocation4 [shape = 's32[1]{0}', space=sflag, size = 0x4, scoped, tag = 'scoped memory for mask_reconstruction_head.1']
    #allocation5 [shape = 'u8[32768]{0}', space=vmem, size = 0x8000, scoped, tag = 'input window, operand 1, single buffered']
    #allocation6 [shape = 's32[1]{0}', space=sflag, size = 0x4, scoped, tag = 'scoped memory for mask_reconstruction_head.1']
    #allocation7 [shape = 'u8[4096]{0}', space=vmem, size = 0x1000, scoped, tag = 'output window, operand 0, single buffered']
    %8 = vsyncpa [#allocation3], 0
    %9 = vsyncpa [#allocation6], 0
    %10 = vsyncpa [#allocation4], 0
    // Predicated region
    $region2: #{mask_reconstruction_head.1} parent=1 // pred_check
      _
    $region3: #{mask_reconstruction_head.1} parent=1 // pred_check_branch
      %12 = sbr.rel (0) target = $region5
    $region4: #{mask_reconstruction_head.1} parent=1 // pred_region
      %14 = vsyncadd [#allocation3], 0
      %s16 = sshll.u32 %s0, 4
      %s17 = int_to_ptr.hbm [resolvable:$true] %s16
      %s18 = sshll.u32 [#allocation2], 4
      %s19 = int_to_ptr.vmem [resolvable:$true] %s18
      %21 = dma.hbm_to_vmem [thread:$0]  %s17, 128, %s19, [#allocation3]
    $region5: #{mask_reconstruction_head.1} parent=1 // pred_fallthru
      _
    // Predicated region
    $region6: #{mask_reconstruction_head.1} parent=1 // pred_check
      _
    $region7: #{mask_reconstruction_head.1} parent=1 // pred_check_branch
      %23 = sbr.rel (0) target = $region9
    $region8: #{mask_reconstruction_head.1} parent=1 // pred_region
      %25 = vsyncadd [#allocation6], 0
      %s26 = sshll.u32 %s1, 4
      %s27 = int_to_ptr.hbm [resolvable:$true] %s26
      %s28 = sshll.u32 [#allocation5], 4
      %s29 = int_to_ptr.vmem [resolvable:$true] %s28
      %34 = dma.hbm_to_vmem [thread:$0]  %s27, 1024, %s29, [#allocation6], 128, 128, 8
    $region9: #{mask_reconstruction_head.1} parent=1 // pred_fallthru
      _
    // Predicated region
    $region10: #{mask_reconstruction_head.1} parent=1 // pred_check
      _
    $region11: #{mask_reconstruction_head.1} parent=1 // pred_check_branch
      %36 = sbr.rel (0) target = $region13
    $region12: #{mask_reconstruction_head.1} parent=1 // pred_region
      _
    $region13: #{mask_reconstruction_head.1} parent=1 // pred_fallthru
      _
    // Predicated region
    $region14: #{mask_reconstruction_head.1} parent=1 // pred_check
      _
    $region15: #{mask_reconstruction_head.1} parent=1 // pred_check_branch
      %38 = sbr.rel (0) target = $region17
    $region16: #{mask_reconstruction_head.1} parent=1 // pred_region
      %40 = dma.done [#allocation3], 128
    $region17: #{mask_reconstruction_head.1} parent=1 // pred_fallthru
      _
    // Predicated region
    $region18: #{mask_reconstruction_head.1} parent=1 // pred_check
      _
    $region19: #{mask_reconstruction_head.1} parent=1 // pred_check_branch
      %42 = sbr.rel (0) target = $region21
    $region20: #{mask_reconstruction_head.1} parent=1 // pred_region
      %44 = dma.done [#allocation6], 1024
    $region21: #{mask_reconstruction_head.1} parent=1 // pred_fallthru
      _
    %v45 = vld [vmem:[#allocation2] sm:$0xff]
    %v46 = vld [vmem:[#allocation5] sm:$0xff]
    %v47 = vld [vmem:[#allocation5 + $0x8] sm:$0xff]
    %v48 = vld [vmem:[#allocation5 + $0x10] sm:$0xff]
    %v49 = vld [vmem:[#allocation5 + $0x18] sm:$0xff]
    %v50 = vld [vmem:[#allocation5 + $0x20] sm:$0xff]
    %v51 = vld [vmem:[#allocation5 + $0x28] sm:$0xff]
    %v52 = vld [vmem:[#allocation5 + $0x30] sm:$0xff]
    %v53 = vld [vmem:[#allocation5 + $0x38] sm:$0xff]
    %v54 = vld [vmem:[%s2] sm:$0x1]
    %v56 = vperm.slane %v54, 0
    %vm58 = vcmask 523264
    %v60 = vsel %vm58, %v45, 0
    %62 = vmatpush.msra.mxu0 0.0
    %63 = vmatpush.msra.mxu0 0.0
    %64 = vmatpush.msra.mxu0 0.0
    %65 = vmatpush.msra.mxu0 0.0
    %66 = vmatpush.msra.mxu0 0.0
    %67 = vmatpush.msra.mxu0 0.0
    %68 = vmatpush.msra.mxu0 0.0
    %69 = vmatpush.msra.mxu0 0.0
    %70 = vmatpush.msra.mxu0 %v53
    %71 = vmatpush.msra.mxu0 %v52
    %72 = vmatpush.msra.mxu0 %v51
    %73 = vmatpush.msra.mxu0 %v50
    %74 = vmatpush.msra.mxu0 %v49
    %75 = vmatpush.msra.mxu0 %v48
    %76 = vmatpush.msra.mxu0 %v47
    %77 = vmatpush.msra.mxu0 %v46
    %78 = vmatmul.f32.gmra.mxu0 %v60
    %v79 = vpop.f32.mrf.mxu0
    %v80 = vadd.f32 %v56, %v79
    %81 = vdwg.mxu0
    %82 = vst [vmem:[#allocation7] sm:$0xff] %v80
    // Predicated region
    $region22: #{mask_reconstruction_head.1} parent=1 // pred_check
      _
    $region23: #{mask_reconstruction_head.1} parent=1 // pred_check_branch
      %84 = sbr.rel (0) target = $region25
    $region24: #{mask_reconstruction_head.1} parent=1 // pred_region
      %86 = vsyncadd [#allocation4], 0
      %s88 = sshll.u32 [#allocation7], 4
      %s89 = int_to_ptr.vmem [resolvable:$true] %s88
      %s90 = sshll.u32 %s3, 4
      %s91 = int_to_ptr.hbm [resolvable:$true] %s90
      %93 = dma.vmem_to_hbm [thread:$0]  %s89, 128, %s91, [#allocation4]
    $region25: #{mask_reconstruction_head.1} parent=1 // pred_fallthru
      _
    // Predicated region
    $region26: #{mask_reconstruction_head.1} parent=1 // pred_check
      _
    $region27: #{mask_reconstruction_head.1} parent=1 // pred_check_branch
      %95 = sbr.rel (0) target = $region29
    $region28: #{mask_reconstruction_head.1} parent=1 // pred_region
      %97 = dma.done [#allocation4], 128
    $region29: #{mask_reconstruction_head.1} parent=1 // pred_fallthru
      _
    %98 = vsyncpa [#allocation3], 1
    %99 = vsyncpa [#allocation6], 1
    %100 = vsyncpa [#allocation4], 1

</llo_original>
